<compile_context>
chip_gen: v5e
topology: v5e:2x2
jax: 0.10.0
libtpu: 0.0.40
codegen_flags: <defaults>
</compile_context>

<pallas_src>
import jax
import jax.numpy as jnp
from jax.experimental import pallas as pl
from jax.experimental.pallas import tpu as pltpu  # noqa: F401  (kept for TPU-specific params if needed)


# ----------------------------- Pallas kernel -------------------------------

def _fused_forward_kernel(x_ref, a_ref, w_ref, b_ref, logit_ref, wdag_ref):
    """Single-step fused kernel.

    x_ref     : (N, C_in, H, W)   raw NCHW image
    a_ref     : (A, n_ops)        all alpha_DAG params stacked along rows
    w_ref     : (9, C_in, 128)    fully folded weight, tap-major (dy, dx)
    b_ref     : (1, 128)          fully folded bias
    logit_ref : (N, 128)          lane-dense padded logits (slice to n_classes outside)
    wdag_ref  : (A, n_ops)        row-softmaxed alphas (weights_DAG, stacked)
    """
    # ---- alpha softmax (weights_DAG) ------------------------------------
    a = a_ref[...]
    m = jnp.max(a, axis=-1, keepdims=True)
    e = jnp.exp(a - m)
    wdag_ref[...] = e / jnp.sum(e, axis=-1, keepdims=True)

    # ---- fused stem conv3x3 + BN -> trunk proj -> GAP -> linear head ----
    # GAP commutes with the affine chain, so only the nine 3x3 "tap sums"
    # (sums of x over sub-rectangles induced by the zero padding) are needed;
    # every weight / the 1/HW factor is already folded into w_ref / b_ref.
    x = x_ref[...]                                   # (N, C, H, W)
    N, C, H, W = x_ref.shape

    r_all = jnp.sum(x, axis=2)                       # rows 0..H-1   (dy = 1)
    r_top = jnp.sum(x[:, :, :H - 1, :], axis=2)      # rows 0..H-2   (dy = 0)
    r_bot = jnp.sum(x[:, :, 1:, :], axis=2)          # rows 1..H-1   (dy = 2)
    row_sums = (r_top, r_all, r_bot)                 # each (N, C, W)

    acc = jnp.zeros((N, b_ref.shape[-1]), dtype=jnp.float32)
    t = 0
    for dy in range(3):
        r = row_sums[dy]
        c_all = jnp.sum(r, axis=2)                   # cols 0..W-1   (dx = 1)
        c_lft = jnp.sum(r[:, :, :W - 1], axis=2)     # cols 0..W-2   (dx = 0)
        c_rgt = jnp.sum(r[:, :, 1:], axis=2)         # cols 1..W-1   (dx = 2)
        for tap in (c_lft, c_all, c_rgt):            # dx = 0, 1, 2
            acc = acc + jnp.dot(tap, w_ref[t],
                                preferred_element_type=jnp.float32)
            t += 1

    logit_ref[...] = acc + b_ref[...]                # (N, 128), lane-dense


def fused_forward(x_nchw, a_stacked, w_fold, b_fold):
    """x: (N,C,H,W), a_stacked: (A,n_ops), w_fold: (9,C,128), b_fold: (1,128)."""
    N, C_in, H, W = x_nchw.shape
    ncls_pad = b_fold.shape[-1]
    return pl.pallas_call(
        _fused_forward_kernel,
        out_shape=(
            jax.ShapeDtypeStruct((N, ncls_pad), jnp.float32),
            jax.ShapeDtypeStruct(a_stacked.shape, a_stacked.dtype),
        ),
        in_specs=[
            pl.BlockSpec((N, C_in, H, W), lambda: (0, 0, 0, 0)),
            pl.BlockSpec(a_stacked.shape, lambda: (0, 0)),
            pl.BlockSpec(w_fold.shape, lambda: (0, 0, 0)),
            pl.BlockSpec(b_fold.shape, lambda: (0, 0)),
        ],
        out_specs=(
            pl.BlockSpec((N, ncls_pad), lambda: (0, 0)),
            pl.BlockSpec(a_stacked.shape, lambda: (0, 0)),
        ),
    )(x_nchw, a_stacked, w_fold, b_fold)


# ------------------------------ glue (JAX) ---------------------------------

_HP = jax.lax.Precision.HIGHEST  # exact f32 folding (TPU default dot is bf16)
_NCLS_PAD = 128                  # lane-dense logits width


def forward(x_nchw, params):
    """Returns (logits (N, n_classes), weights_DAG list) like the PyTorch module."""
    N, C_in, H, W = x_nchw.shape
    n_classes = params["lin_w"].shape[1]

    # --- stack alphas along rows; row softmax is independent per row --------
    alphas = params["alpha_DAG"]
    row_counts = [a.shape[0] for a in alphas]
    a_stacked = jnp.concatenate(alphas, axis=0)                 # (A, n_ops)

    # --- fold stem conv + BN (inference form) + placeholder trunk + head ----
    w = params["stem_w"]                                        # (Cout, Cin, 3, 3)
    Cout = w.shape[0]
    wmat = jnp.transpose(w, (2, 3, 1, 0)).reshape(9 * C_in, Cout)   # rows (dy,dx,cin)
    inv_std = 1.0 / jnp.sqrt(params["bn_var"] + 1e-5)
    scale = params["bn_gamma"] * inv_std
    shift = (params["bn_beta"] - params["bn_mean"] * scale).reshape(1, Cout)
    wmat_scaled = wmat * scale[None, :]                         # BN scale folded

    lin_w_pad = jnp.pad(params["lin_w"], ((0, 0), (0, _NCLS_PAD - n_classes)))
    lin_b_pad = jnp.pad(params["lin_b"].reshape(1, -1),
                        ((0, 0), (0, _NCLS_PAD - n_classes)))
    head = jnp.dot(params["proj_w"], lin_w_pad, precision=_HP)  # (Cout, 128)
    w_fold = jnp.dot(wmat_scaled, head, precision=_HP) / float(H * W)  # (9*Cin, 128)
    w_fold = w_fold.reshape(9, C_in, _NCLS_PAD)                 # tap-major
    b_fold = jnp.dot(shift, head, precision=_HP) + lin_b_pad    # (1, 128)

    # --- single fused kernel: softmax + stem/GAP/trunk/head -----------------
    logits_pad, wdag_stacked = fused_forward(x_nchw, a_stacked, w_fold, b_fold)

    logits = logits_pad[:, :n_classes]
    weights_DAG, off = [], 0
    for r in row_counts:
        weights_DAG.append(wdag_stacked[off:off + r])
        off += r
    return logits, weights_DAG


def reference_forward(x_nchw, params):
    """Pure-JAX reference of the same (placeholder-trunk) network, for checking."""
    y = jax.lax.conv_general_dilated(
        x_nchw, params["stem_w"], window_strides=(1, 1), padding="SAME",
        dimension_numbers=("NCHW", "OIHW", "NCHW"), precision=_HP)
    inv_std = 1.0 / jnp.sqrt(params["bn_var"] + 1e-5)
    scale = params["bn_gamma"] * inv_std
    shift = params["bn_beta"] - params["bn_mean"] * scale
    y = y * scale[None, :, None, None] + shift[None, :, None, None]
    pooled = jnp.mean(y, axis=(2, 3))                           # GAP
    feats = jnp.dot(pooled, params["proj_w"], precision=_HP)    # placeholder trunk
    return jnp.dot(feats, params["lin_w"], precision=_HP) + params["lin_b"]


# --------------------------------- main -------------------------------------

if __name__ == "__main__":
    key = jax.random.PRNGKey(0)

    # Small config consistent with the module: n_layers=6 -> n_big_nodes=2,
    # slide_window=3, stem_multiplier=4, C=4, C_in=3, n_classes=10.
    N, C_in, HW = 2, 3, 16
    C = 4
    n_classes = 10
    n_layers = 6
    n_big_nodes = n_layers // 3
    window = 3
    N_OPS = 8          # len(gt.PRIMITIVES2) not provided; assume 8 primitives
    C_stem = 4 * C     # stem_multiplier * C
    C_feat = 32 * C    # nn.Linear(32 * C, n_classes) input width

    keys = jax.random.split(key, 16)

    # alpha_DAG: 3 groups of n_big_nodes params, shape (min(i+2, window), n_ops)
    alpha_DAG = []
    ki = 0
    for _ in range(3):
        for i in range(n_big_nodes):
            rows = i + 2 if i + 2 < window else window
            alpha_DAG.append(
                0.001 * jax.random.normal(keys[ki], (rows, N_OPS), jnp.float32))
            ki += 1

    params = {
        "alpha_DAG": alpha_DAG,
        "stem_w": 0.1 * jax.random.normal(keys[6], (C_stem, C_in, 3, 3), jnp.float32),
        "bn_gamma": jnp.ones((C_stem,), jnp.float32),
        "bn_beta": jnp.zeros((C_stem,), jnp.float32),
        "bn_mean": jnp.zeros((C_stem,), jnp.float32),
        "bn_var": jnp.ones((C_stem,), jnp.float32),
        "proj_w": 0.1 * jax.random.normal(keys[7], (C_stem, C_feat), jnp.float32),
        "lin_w": 0.1 * jax.random.normal(keys[8], (C_feat, n_classes), jnp.float32),
        "lin_b": jnp.zeros((n_classes,), jnp.float32),
    }

    x = jax.random.normal(keys[9], (N, C_in, HW, HW), jnp.float32)  # NCHW input

    logits, weights_DAG = jax.jit(forward)(x, params)
    jax.block_until_ready(logits)
    jax.block_until_ready(weights_DAG)

    # ---- correctness checks against the pure-JAX reference -----------------
    ref_logits = reference_forward(x, params)
    assert logits.shape == (N, n_classes)
    assert bool(jnp.allclose(logits, ref_logits, atol=1e-3, rtol=1e-3))
    for w_sm, a in zip(weights_DAG, alpha_DAG):
        assert w_sm.shape == a.shape
        assert bool(jnp.allclose(jnp.sum(w_sm, axis=-1), 1.0, atol=1e-5))
        assert bool(jnp.allclose(w_sm, jax.nn.softmax(a, axis=-1), atol=1e-5))
    print("KERNEL_OK")
</pallas_src>

<mosaic_0001>
module attributes {stable_mosaic.version = 11 : i64} {
  func.func @_fused_forward_kernel(%arg0: memref<2x3x16x16xf32, #tpu.memory_space<vmem>>, %arg1: memref<15x8xf32, #tpu.memory_space<vmem>>, %arg2: memref<9x3x128xf32, #tpu.memory_space<vmem>>, %arg3: memref<1x128xf32, #tpu.memory_space<vmem>>, %arg4: memref<2x128xf32, #tpu.memory_space<vmem>>, %arg5: memref<15x8xf32, #tpu.memory_space<vmem>>) attributes {dimension_semantics = [], scalar_prefetch = 0 : i64, scratch_operands = 0 : i64, tpu.core_type = #tpu.core_type<tc>} {
    %c0 = arith.constant 0 : index
    %c0_0 = arith.constant 0 : index
    %0 = vector.load %arg1[%c0, %c0_0] : memref<15x8xf32, #tpu.memory_space<vmem>>, vector<15x8xf32>
    %cst = arith.constant dense<0xFF800000> : vector<15xf32>
    %1 = vector.multi_reduction <maximumf>, %0, %cst [1] : vector<15x8xf32> to vector<15xf32>
    %2 = vector.shape_cast %1 : vector<15xf32> to vector<15x1xf32>
    %3 = vector.broadcast %2 : vector<15x1xf32> to vector<15x8xf32>
    %4 = arith.subf %0, %3 : vector<15x8xf32>
    %5 = math.exp %4 : vector<15x8xf32>
    %cst_1 = arith.constant dense<0.000000e+00> : vector<15xf32>
    %6 = vector.multi_reduction <add>, %5, %cst_1 [1] : vector<15x8xf32> to vector<15xf32>
    %7 = vector.shape_cast %6 : vector<15xf32> to vector<15x1xf32>
    %8 = vector.broadcast %7 : vector<15x1xf32> to vector<15x8xf32>
    %9 = arith.divf %5, %8 : vector<15x8xf32>
    %c0_2 = arith.constant 0 : index
    %c0_3 = arith.constant 0 : index
    %10 = vector.load %arg5[%c0_2, %c0_3] : memref<15x8xf32, #tpu.memory_space<vmem>>, vector<15x8xf32>
    tpu.vector_store %arg5[%c0_2, %c0_3], %9 {strides = array<i32>} : memref<15x8xf32, #tpu.memory_space<vmem>>, vector<15x8xf32>,
    %c0_4 = arith.constant 0 : index
    %c0_5 = arith.constant 0 : index
    %c0_6 = arith.constant 0 : index
    %c0_7 = arith.constant 0 : index
    %11 = vector.load %arg0[%c0_4, %c0_5, %c0_6, %c0_7] : memref<2x3x16x16xf32, #tpu.memory_space<vmem>>, vector<2x3x16x16xf32>
    %cst_8 = arith.constant dense<0.000000e+00> : vector<2x3x16xf32>
    %12 = vector.multi_reduction <add>, %11, %cst_8 [2] : vector<2x3x16x16xf32> to vector<2x3x16xf32>
    %13 = vector.extract_strided_slice %11 {offsets = [0, 0, 0, 0], sizes = [2, 3, 15, 16], strides = [1, 1, 1, 1]} : vector<2x3x16x16xf32> to vector<2x3x15x16xf32>
    %cst_9 = arith.constant dense<0.000000e+00> : vector<2x3x16xf32>
    %14 = vector.multi_reduction <add>, %13, %cst_9 [2] : vector<2x3x15x16xf32> to vector<2x3x16xf32>
    %15 = vector.extract_strided_slice %11 {offsets = [0, 0, 1, 0], sizes = [2, 3, 15, 16], strides = [1, 1, 1, 1]} : vector<2x3x16x16xf32> to vector<2x3x15x16xf32>
    %cst_10 = arith.constant dense<0.000000e+00> : vector<2x3x16xf32>
    %16 = vector.multi_reduction <add>, %15, %cst_10 [2] : vector<2x3x15x16xf32> to vector<2x3x16xf32>
    %cst_11 = arith.constant 0.000000e+00 : f32
    %17 = vector.broadcast %cst_11 : f32 to vector<2x128xf32>
    %cst_12 = arith.constant dense<0.000000e+00> : vector<2x3xf32>
    %18 = vector.multi_reduction <add>, %14, %cst_12 [2] : vector<2x3x16xf32> to vector<2x3xf32>
    %19 = vector.extract_strided_slice %14 {offsets = [0, 0, 0], sizes = [2, 3, 15], strides = [1, 1, 1]} : vector<2x3x16xf32> to vector<2x3x15xf32>
    %cst_13 = arith.constant dense<0.000000e+00> : vector<2x3xf32>
    %20 = vector.multi_reduction <add>, %19, %cst_13 [2] : vector<2x3x15xf32> to vector<2x3xf32>
    %21 = vector.extract_strided_slice %14 {offsets = [0, 0, 1], sizes = [2, 3, 15], strides = [1, 1, 1]} : vector<2x3x16xf32> to vector<2x3x15xf32>
    %cst_14 = arith.constant dense<0.000000e+00> : vector<2x3xf32>
    %22 = vector.multi_reduction <add>, %21, %cst_14 [2] : vector<2x3x15xf32> to vector<2x3xf32>
    %c0_15 = arith.constant 0 : index
    %c0_16 = arith.constant 0 : index
    %c0_17 = arith.constant 0 : index
    %23 = vector.load %arg2[%c0_15, %c0_16, %c0_17] : memref<9x3x128xf32, #tpu.memory_space<vmem>>, vector<1x3x128xf32>
    %24 = vector.shape_cast %23 : vector<1x3x128xf32> to vector<3x128xf32>
    %cst_18 = arith.constant dense<0.000000e+00> : vector<2x128xf32>
    %25 = tpu.matmul %20, %24, %cst_18 {dimension_numbers = #tpu.dot_dimension_numbers<[1], [0], [0], [1], [0, 0, 1, 1], [], []>} : vector<2x3xf32>, vector<3x128xf32>, vector<2x128xf32> -> vector<2x128xf32>
    %26 = arith.addf %17, %25 : vector<2x128xf32>
    %c1 = arith.constant 1 : index
    %c0_19 = arith.constant 0 : index
    %c0_20 = arith.constant 0 : index
    %27 = vector.load %arg2[%c1, %c0_19, %c0_20] : memref<9x3x128xf32, #tpu.memory_space<vmem>>, vector<1x3x128xf32>
    %28 = vector.shape_cast %27 : vector<1x3x128xf32> to vector<3x128xf32>
    %cst_21 = arith.constant dense<0.000000e+00> : vector<2x128xf32>
    %29 = tpu.matmul %18, %28, %cst_21 {dimension_numbers = #tpu.dot_dimension_numbers<[1], [0], [0], [1], [0, 0, 1, 1], [], []>} : vector<2x3xf32>, vector<3x128xf32>, vector<2x128xf32> -> vector<2x128xf32>
    %30 = arith.addf %26, %29 : vector<2x128xf32>
    %c2 = arith.constant 2 : index
    %c0_22 = arith.constant 0 : index
    %c0_23 = arith.constant 0 : index
    %31 = vector.load %arg2[%c2, %c0_22, %c0_23] : memref<9x3x128xf32, #tpu.memory_space<vmem>>, vector<1x3x128xf32>
    %32 = vector.shape_cast %31 : vector<1x3x128xf32> to vector<3x128xf32>
    %cst_24 = arith.constant dense<0.000000e+00> : vector<2x128xf32>
    %33 = tpu.matmul %22, %32, %cst_24 {dimension_numbers = #tpu.dot_dimension_numbers<[1], [0], [0], [1], [0, 0, 1, 1], [], []>} : vector<2x3xf32>, vector<3x128xf32>, vector<2x128xf32> -> vector<2x128xf32>
    %34 = arith.addf %30, %33 : vector<2x128xf32>
    %cst_25 = arith.constant dense<0.000000e+00> : vector<2x3xf32>
    %35 = vector.multi_reduction <add>, %12, %cst_25 [2] : vector<2x3x16xf32> to vector<2x3xf32>
    %36 = vector.extract_strided_slice %12 {offsets = [0, 0, 0], sizes = [2, 3, 15], strides = [1, 1, 1]} : vector<2x3x16xf32> to vector<2x3x15xf32>
    %cst_26 = arith.constant dense<0.000000e+00> : vector<2x3xf32>
    %37 = vector.multi_reduction <add>, %36, %cst_26 [2] : vector<2x3x15xf32> to vector<2x3xf32>
    %38 = vector.extract_strided_slice %12 {offsets = [0, 0, 1], sizes = [2, 3, 15], strides = [1, 1, 1]} : vector<2x3x16xf32> to vector<2x3x15xf32>
    %cst_27 = arith.constant dense<0.000000e+00> : vector<2x3xf32>
    %39 = vector.multi_reduction <add>, %38, %cst_27 [2] : vector<2x3x15xf32> to vector<2x3xf32>
    %c3 = arith.constant 3 : index
    %c0_28 = arith.constant 0 : index
    %c0_29 = arith.constant 0 : index
    %40 = vector.load %arg2[%c3, %c0_28, %c0_29] : memref<9x3x128xf32, #tpu.memory_space<vmem>>, vector<1x3x128xf32>
    %41 = vector.shape_cast %40 : vector<1x3x128xf32> to vector<3x128xf32>
    %cst_30 = arith.constant dense<0.000000e+00> : vector<2x128xf32>
    %42 = tpu.matmul %37, %41, %cst_30 {dimension_numbers = #tpu.dot_dimension_numbers<[1], [0], [0], [1], [0, 0, 1, 1], [], []>} : vector<2x3xf32>, vector<3x128xf32>, vector<2x128xf32> -> vector<2x128xf32>
    %43 = arith.addf %34, %42 : vector<2x128xf32>
    %c4 = arith.constant 4 : index
    %c0_31 = arith.constant 0 : index
    %c0_32 = arith.constant 0 : index
    %44 = vector.load %arg2[%c4, %c0_31, %c0_32] : memref<9x3x128xf32, #tpu.memory_space<vmem>>, vector<1x3x128xf32>
    %45 = vector.shape_cast %44 : vector<1x3x128xf32> to vector<3x128xf32>
    %cst_33 = arith.constant dense<0.000000e+00> : vector<2x128xf32>
    %46 = tpu.matmul %35, %45, %cst_33 {dimension_numbers = #tpu.dot_dimension_numbers<[1], [0], [0], [1], [0, 0, 1, 1], [], []>} : vector<2x3xf32>, vector<3x128xf32>, vector<2x128xf32> -> vector<2x128xf32>
    %47 = arith.addf %43, %46 : vector<2x128xf32>
    %c5 = arith.constant 5 : index
    %c0_34 = arith.constant 0 : index
    %c0_35 = arith.constant 0 : index
    %48 = vector.load %arg2[%c5, %c0_34, %c0_35] : memref<9x3x128xf32, #tpu.memory_space<vmem>>, vector<1x3x128xf32>
    %49 = vector.shape_cast %48 : vector<1x3x128xf32> to vector<3x128xf32>
    %cst_36 = arith.constant dense<0.000000e+00> : vector<2x128xf32>
    %50 = tpu.matmul %39, %49, %cst_36 {dimension_numbers = #tpu.dot_dimension_numbers<[1], [0], [0], [1], [0, 0, 1, 1], [], []>} : vector<2x3xf32>, vector<3x128xf32>, vector<2x128xf32> -> vector<2x128xf32>
    %51 = arith.addf %47, %50 : vector<2x128xf32>
    %cst_37 = arith.constant dense<0.000000e+00> : vector<2x3xf32>
    %52 = vector.multi_reduction <add>, %16, %cst_37 [2] : vector<2x3x16xf32> to vector<2x3xf32>
    %53 = vector.extract_strided_slice %16 {offsets = [0, 0, 0], sizes = [2, 3, 15], strides = [1, 1, 1]} : vector<2x3x16xf32> to vector<2x3x15xf32>
    %cst_38 = arith.constant dense<0.000000e+00> : vector<2x3xf32>
    %54 = vector.multi_reduction <add>, %53, %cst_38 [2] : vector<2x3x15xf32> to vector<2x3xf32>
    %55 = vector.extract_strided_slice %16 {offsets = [0, 0, 1], sizes = [2, 3, 15], strides = [1, 1, 1]} : vector<2x3x16xf32> to vector<2x3x15xf32>
    %cst_39 = arith.constant dense<0.000000e+00> : vector<2x3xf32>
    %56 = vector.multi_reduction <add>, %55, %cst_39 [2] : vector<2x3x15xf32> to vector<2x3xf32>
    %c6 = arith.constant 6 : index
    %c0_40 = arith.constant 0 : index
    %c0_41 = arith.constant 0 : index
    %57 = vector.load %arg2[%c6, %c0_40, %c0_41] : memref<9x3x128xf32, #tpu.memory_space<vmem>>, vector<1x3x128xf32>
    %58 = vector.shape_cast %57 : vector<1x3x128xf32> to vector<3x128xf32>
    %cst_42 = arith.constant dense<0.000000e+00> : vector<2x128xf32>
    %59 = tpu.matmul %54, %58, %cst_42 {dimension_numbers = #tpu.dot_dimension_numbers<[1], [0], [0], [1], [0, 0, 1, 1], [], []>} : vector<2x3xf32>, vector<3x128xf32>, vector<2x128xf32> -> vector<2x128xf32>
    %60 = arith.addf %51, %59 : vector<2x128xf32>
    %c7 = arith.constant 7 : index
    %c0_43 = arith.constant 0 : index
    %c0_44 = arith.constant 0 : index
    %61 = vector.load %arg2[%c7, %c0_43, %c0_44] : memref<9x3x128xf32, #tpu.memory_space<vmem>>, vector<1x3x128xf32>
    %62 = vector.shape_cast %61 : vector<1x3x128xf32> to vector<3x128xf32>
    %cst_45 = arith.constant dense<0.000000e+00> : vector<2x128xf32>
    %63 = tpu.matmul %52, %62, %cst_45 {dimension_numbers = #tpu.dot_dimension_numbers<[1], [0], [0], [1], [0, 0, 1, 1], [], []>} : vector<2x3xf32>, vector<3x128xf32>, vector<2x128xf32> -> vector<2x128xf32>
    %64 = arith.addf %60, %63 : vector<2x128xf32>
    %c8 = arith.constant 8 : index
    %c0_46 = arith.constant 0 : index
    %c0_47 = arith.constant 0 : index
    %65 = vector.load %arg2[%c8, %c0_46, %c0_47] : memref<9x3x128xf32, #tpu.memory_space<vmem>>, vector<1x3x128xf32>
    %66 = vector.shape_cast %65 : vector<1x3x128xf32> to vector<3x128xf32>
    %cst_48 = arith.constant dense<0.000000e+00> : vector<2x128xf32>
    %67 = tpu.matmul %56, %66, %cst_48 {dimension_numbers = #tpu.dot_dimension_numbers<[1], [0], [0], [1], [0, 0, 1, 1], [], []>} : vector<2x3xf32>, vector<3x128xf32>, vector<2x128xf32> -> vector<2x128xf32>
    %68 = arith.addf %64, %67 : vector<2x128xf32>
    %c0_49 = arith.constant 0 : index
    %c0_50 = arith.constant 0 : index
    %69 = vector.load %arg3[%c0_49, %c0_50] : memref<1x128xf32, #tpu.memory_space<vmem>>, vector<1x128xf32>
    %70 = vector.broadcast %69 : vector<1x128xf32> to vector<2x128xf32>
    %71 = arith.addf %68, %70 : vector<2x128xf32>
    %c0_51 = arith.constant 0 : index
    %c0_52 = arith.constant 0 : index
    %72 = vector.load %arg4[%c0_51, %c0_52] : memref<2x128xf32, #tpu.memory_space<vmem>>, vector<2x128xf32>
    tpu.vector_store %arg4[%c0_51, %c0_52], %71 {strides = array<i32>} : memref<2x128xf32, #tpu.memory_space<vmem>>, vector<2x128xf32>,
    return
  }
}

</mosaic_0001>

<llo_original>
// kernel: forward.1
$region0: #{forward.1}
  #allocation0 [shape = 'u32[]', space=smem, size = 0x4, offset = 0x4, fixed_abs, tag = 'smem constant byte address 0x4 - core index']
  #allocation1 [shape = 'u32[72,128]{1,0:T(1,128)}', space=vmem, size = 0x9000, scoped, tag = 'internal scratch']
  %s0 = inlined_call_operand.vmem [shape: f32[2,3,16,16], index: 0, kind: input, shape index: {}]
  %s1 = inlined_call_operand.vmem [shape: f32[15,8], index: 1, kind: input, shape index: {}]
  %s2 = inlined_call_operand.vmem [shape: f32[9,3,128], index: 2, kind: input, shape index: {}]
  %s3 = inlined_call_operand.vmem [shape: f32[1,128], index: 3, kind: input, shape index: {}]
  %s4 = inlined_call_operand.hbm [shape: f32[2,128], index: 4, kind: output, shape index: {0}]
  %s5 = inlined_call_operand.vmem [shape: f32[15,8], index: 5, kind: output, shape index: {1}]
  %6 = xla_tuple %s4, %s5
  %s7 = sld [smem:[#allocation0]]
  $region34: #{forward.1} parent=0
    _
  %s9 = ssub.s32 1, %s7
  %s10 = scalar_select 0, %s9, %s7
  $region1: #{forward.1} parent=0
    #allocation2 [shape = 'u8[1024]{0}', space=vmem, size = 0x400, scoped, tag = 'output window, operand 0, single buffered']
    #allocation3 [shape = 's32[1]{0}', space=sflag, size = 0x4, scoped, tag = 'scoped memory for forward.1']
    %11 = vsyncpa [#allocation3], 0
    // Predicated region
    $region2: #{forward.1} parent=1 // pred_check
      _
    $region3: #{forward.1} parent=1 // pred_check_branch
      %13 = sbr.rel (0) target = $region5
    $region4: #{forward.1} parent=1 // pred_region
      _
    $region5: #{forward.1} parent=1 // pred_fallthru
      _
    // Predicated region
    $region6: #{forward.1} parent=1 // pred_check
      _
    $region7: #{forward.1} parent=1 // pred_check_branch
      %15 = sbr.rel (0) target = $region9
    $region8: #{forward.1} parent=1 // pred_region
      _
    $region9: #{forward.1} parent=1 // pred_fallthru
      _
    // Predicated region
    $region10: #{forward.1} parent=1 // pred_check
      _
    $region11: #{forward.1} parent=1 // pred_check_branch
      %17 = sbr.rel (0) target = $region13
    $region12: #{forward.1} parent=1 // pred_region
      _
    $region13: #{forward.1} parent=1 // pred_fallthru
      _
    // Predicated region
    $region14: #{forward.1} parent=1 // pred_check
      _
    $region15: #{forward.1} parent=1 // pred_check_branch
      %19 = sbr.rel (0) target = $region17
    $region16: #{forward.1} parent=1 // pred_region
      _
    $region17: #{forward.1} parent=1 // pred_fallthru
      _
    %v20 = vld [vmem:[%s1] sm:$0xff]
    %v21 = vld [vmem:[%s1 + $0x8] sm:$0x7f]
    %vm22 = vcmask 64512
    %v23 = vsel %vm22, %v20, -inf
    %24 = vmax.xlane.f32.xlu0 %v23
    %v25 = vpop.xlane.xlu0 %24
    %vm26 = vcmask 63488
    %v27 = vsel %vm26, %v21, -inf
    %28 = vmax.xlane.f32.xlu0 %v27
    %v29 = vpop.xlane.xlu0 %28
    %v30 = vsub.f32 %v20, %v25
    %v31 = vsub.f32 %v21, %v29
    %v32 = vmul.f32 %v30, 1.442695
    %v33 = vpow.pop %v32
    %v34 = vmul.f32 %v31, 1.442695
    %v35 = vpow.pop %v34
    %v36 = vsel %vm22, %v33, 0.0
    %37 = vadd.xlane.f32.xlu0 %v36
    %v38 = vpop.xlane.xlu0 %37
    %v39 = vsel %vm26, %v35, 0.0
    %40 = vadd.xlane.f32.xlu0 %v39
    %v41 = vpop.xlane.xlu0 %40
    %v42 = vrcp.pop %v38
    %v43 = vmul.f32 %v38, %v42
    %v44 = vsub.f32 1.0, %v43
    %v45 = vmul.f32 %v42, %v44
    %v46 = vadd.f32 %v42, %v45
    %vm47 = vweird.f32 %v38
    %vm48 = vweird.f32 %v42
    %vm49 = vmor %vm47, %vm48
    %v50 = vsel %vm49, %v42, %v46
    %v51 = vand.u32 2147483647, %v38
    %vm52 = vcmp.eq.f32.partialorder %v51, 8.507059e+37
    %v53 = vand.u32 %v38, 2147483648
    %v54 = vor.u32 1.1754944e-38, %v53
    %v55 = vsel %vm52, %v54, %v50
    %v56 = vmul.f32 %v33, %v55
    %v57 = vrcp.pop %v41
    %v58 = vmul.f32 %v41, %v57
    %v59 = vsub.f32 1.0, %v58
    %v60 = vmul.f32 %v57, %v59
    %v61 = vadd.f32 %v57, %v60
    %vm62 = vweird.f32 %v41
    %vm63 = vweird.f32 %v57
    %vm64 = vmor %vm62, %vm63
    %v65 = vsel %vm64, %v57, %v61
    %v66 = vand.u32 2147483647, %v41
    %vm67 = vcmp.eq.f32.partialorder %v66, 8.507059e+37
    %v68 = vand.u32 %v41, 2147483648
    %v69 = vor.u32 1.1754944e-38, %v68
    %v70 = vsel %vm67, %v69, %v65
    %v71 = vmul.f32 %v35, %v70
    %72 = vst.msk [vmem:[%s5] sm:$0xff] %vm22, %v56
    %73 = vst.msk [vmem:[%s5 + $0x8] sm:$0x7f] %vm26, %v71
    %v74 = vld [vmem:[%s0] sm:$0xff]
    %v75 = vld [vmem:[%s0 + $0x8] sm:$0xff]
    %v76 = vld [vmem:[%s0 + $0x10] sm:$0xff]
    %v77 = vld [vmem:[%s0 + $0x18] sm:$0xff]
    %v78 = vld [vmem:[%s0 + $0x20] sm:$0xff]
    %v79 = vld [vmem:[%s0 + $0x28] sm:$0xff]
    %v80 = vld [vmem:[%s0 + $0x30] sm:$0xff]
    %v81 = vld [vmem:[%s0 + $0x38] sm:$0xff]
    %v82 = vld [vmem:[%s0 + $0x40] sm:$0xff]
    %v83 = vld [vmem:[%s0 + $0x48] sm:$0xff]
    %v84 = vld [vmem:[%s0 + $0x50] sm:$0xff]
    %v85 = vld [vmem:[%s0 + $0x58] sm:$0xff]
    %vm86 = vcmask 130048
    %v87 = vsel %vm86, %v74, 0.0
    %v88 = vsel %vm86, %v75, 0.0
    %v89 = vadd.f32 %v87, %v88
    %v90 = vrot.slane %v89, 4
    %v91 = vadd.f32 %v89, %v90
    %v92 = vrot.slane %v91, 2
    %v93 = vadd.f32 %v91, %v92
    %v94 = vrot.slane %v93, 1
    %v95 = vadd.f32 %v93, %v94
    %v96 = vsel %vm86, %v76, 0.0
    %v97 = vsel %vm86, %v77, 0.0
    %v98 = vadd.f32 %v96, %v97
    %v99 = vrot.slane %v98, 4
    %v100 = vadd.f32 %v98, %v99
    %v101 = vrot.slane %v100, 2
    %v102 = vadd.f32 %v100, %v101
    %v103 = vrot.slane %v102, 1
    %v104 = vadd.f32 %v102, %v103
    %v105 = vsel %vm86, %v78, 0.0
    %v106 = vsel %vm86, %v79, 0.0
    %v107 = vadd.f32 %v105, %v106
    %v108 = vrot.slane %v107, 4
    %v109 = vadd.f32 %v107, %v108
    %v110 = vrot.slane %v109, 2
    %v111 = vadd.f32 %v109, %v110
    %v112 = vrot.slane %v111, 1
    %v113 = vadd.f32 %v111, %v112
    %v114 = vsel %vm86, %v80, 0.0
    %v115 = vsel %vm86, %v81, 0.0
    %v116 = vadd.f32 %v114, %v115
    %v117 = vrot.slane %v116, 4
    %v118 = vadd.f32 %v116, %v117
    %v119 = vrot.slane %v118, 2
    %v120 = vadd.f32 %v118, %v119
    %v121 = vrot.slane %v120, 1
    %v122 = vadd.f32 %v120, %v121
    %v123 = vsel %vm86, %v82, 0.0
    %v124 = vsel %vm86, %v83, 0.0
    %v125 = vadd.f32 %v123, %v124
    %v126 = vrot.slane %v125, 4
    %v127 = vadd.f32 %v125, %v126
    %v128 = vrot.slane %v127, 2
    %v129 = vadd.f32 %v127, %v128
    %v130 = vrot.slane %v129, 1
    %v131 = vadd.f32 %v129, %v130
    %v132 = vsel %vm86, %v84, 0.0
    %v133 = vsel %vm86, %v85, 0.0
    %v134 = vadd.f32 %v132, %v133
    %v135 = vrot.slane %v134, 4
    %v136 = vadd.f32 %v134, %v135
    %v137 = vrot.slane %v136, 2
    %v138 = vadd.f32 %v136, %v137
    %v139 = vrot.slane %v138, 1
    %v140 = vadd.f32 %v138, %v139
    %vm141 = vcmask 129024
    %v142 = vsel %vm141, %v75, 0.0
    %v143 = vadd.f32 %v87, %v142
    %v144 = vrot.slane %v143, 4
    %v145 = vadd.f32 %v143, %v144
    %v146 = vrot.slane %v145, 2
    %v147 = vadd.f32 %v145, %v146
    %v148 = vrot.slane %v147, 1
    %v149 = vadd.f32 %v147, %v148
    %v150 = vsel %vm141, %v77, 0.0
    %v151 = vadd.f32 %v96, %v150
    %v152 = vrot.slane %v151, 4
    %v153 = vadd.f32 %v151, %v152
    %v154 = vrot.slane %v153, 2
    %v155 = vadd.f32 %v153, %v154
    %v156 = vrot.slane %v155, 1
    %v157 = vadd.f32 %v155, %v156
    %v158 = vsel %vm141, %v79, 0.0
    %v159 = vadd.f32 %v105, %v158
    %v160 = vrot.slane %v159, 4
    %v161 = vadd.f32 %v159, %v160
    %v162 = vrot.slane %v161, 2
    %v163 = vadd.f32 %v161, %v162
    %v164 = vrot.slane %v163, 1
    %v165 = vadd.f32 %v163, %v164
    %v166 = vsel %vm141, %v81, 0.0
    %v167 = vadd.f32 %v114, %v166
    %v168 = vrot.slane %v167, 4
    %v169 = vadd.f32 %v167, %v168
    %v170 = vrot.slane %v169, 2
    %v171 = vadd.f32 %v169, %v170
    %v172 = vrot.slane %v171, 1
    %v173 = vadd.f32 %v171, %v172
    %v174 = vsel %vm141, %v83, 0.0
    %v175 = vadd.f32 %v123, %v174
    %v176 = vrot.slane %v175, 4
    %v177 = vadd.f32 %v175, %v176
    %v178 = vrot.slane %v177, 2
    %v179 = vadd.f32 %v177, %v178
    %v180 = vrot.slane %v179, 1
    %v181 = vadd.f32 %v179, %v180
    %v182 = vsel %vm141, %v85, 0.0
    %v183 = vadd.f32 %v132, %v182
    %v184 = vrot.slane %v183, 4
    %v185 = vadd.f32 %v183, %v184
    %v186 = vrot.slane %v185, 2
    %v187 = vadd.f32 %v185, %v186
    %v188 = vrot.slane %v187, 1
    %v189 = vadd.f32 %v187, %v188
    %vm202 = vcmask 1046528
    %v203 = vrot.slane %v74, 1
    %v204 = vrot.slane %v75, 1
    %v205 = vsel %vm202, %v203, %v204
    %v206 = vrot.slane %v76, 1
    %v207 = vrot.slane %v77, 1
    %v208 = vsel %vm202, %v206, %v207
    %v209 = vrot.slane %v78, 1
    %v210 = vrot.slane %v79, 1
    %v211 = vsel %vm202, %v209, %v210
    %v212 = vrot.slane %v80, 1
    %v213 = vrot.slane %v81, 1
    %v214 = vsel %vm202, %v212, %v213
    %v215 = vrot.slane %v82, 1
    %v216 = vrot.slane %v83, 1
    %v217 = vsel %vm202, %v215, %v216
    %v218 = vrot.slane %v84, 1
    %v219 = vrot.slane %v85, 1
    %v220 = vsel %vm202, %v218, %v219
    %v233 = vsel %vm86, %v205, 0.0
    %v234 = vsel %vm141, %v204, 0.0
    %v235 = vadd.f32 %v233, %v234
    %v236 = vrot.slane %v235, 4
    %v237 = vadd.f32 %v235, %v236
    %v238 = vrot.slane %v237, 2
    %v239 = vadd.f32 %v237, %v238
    %v240 = vrot.slane %v239, 1
    %v241 = vadd.f32 %v239, %v240
    %v242 = vsel %vm86, %v208, 0.0
    %v243 = vsel %vm141, %v207, 0.0
    %v244 = vadd.f32 %v242, %v243
    %v245 = vrot.slane %v244, 4
    %v246 = vadd.f32 %v244, %v245
    %v247 = vrot.slane %v246, 2
    %v248 = vadd.f32 %v246, %v247
    %v249 = vrot.slane %v248, 1
    %v250 = vadd.f32 %v248, %v249
    %v251 = vsel %vm86, %v211, 0.0
    %v252 = vsel %vm141, %v210, 0.0
    %v253 = vadd.f32 %v251, %v252
    %v254 = vrot.slane %v253, 4
    %v255 = vadd.f32 %v253, %v254
    %v256 = vrot.slane %v255, 2
    %v257 = vadd.f32 %v255, %v256
    %v258 = vrot.slane %v257, 1
    %v259 = vadd.f32 %v257, %v258
    %v260 = vsel %vm86, %v214, 0.0
    %v261 = vsel %vm141, %v213, 0.0
    %v262 = vadd.f32 %v260, %v261
    %v263 = vrot.slane %v262, 4
    %v264 = vadd.f32 %v262, %v263
    %v265 = vrot.slane %v264, 2
    %v266 = vadd.f32 %v264, %v265
    %v267 = vrot.slane %v266, 1
    %v268 = vadd.f32 %v266, %v267
    %v269 = vsel %vm86, %v217, 0.0
    %v270 = vsel %vm141, %v216, 0.0
    %v271 = vadd.f32 %v269, %v270
    %v272 = vrot.slane %v271, 4
    %v273 = vadd.f32 %v271, %v272
    %v274 = vrot.slane %v273, 2
    %v275 = vadd.f32 %v273, %v274
    %v276 = vrot.slane %v275, 1
    %v277 = vadd.f32 %v275, %v276
    %v278 = vsel %vm86, %v220, 0.0
    %v279 = vsel %vm141, %v219, 0.0
    %v280 = vadd.f32 %v278, %v279
    %v281 = vrot.slane %v280, 4
    %v282 = vadd.f32 %v280, %v281
    %v283 = vrot.slane %v282, 2
    %v284 = vadd.f32 %v282, %v283
    %v285 = vrot.slane %v284, 1
    %v286 = vadd.f32 %v284, %v285
    %vm293 = vcmask 1041409
    %v294 = vsel %vm293, %v157, %v149
    %vm295 = vcmask 1042434
    %v296 = vsel %vm295, %v165, %v294
    %v297 = vsel %vm293, %v181, %v173
    %v298 = vsel %vm295, %v189, %v297
    %vm301 = vcmask 124928
    %v302 = vsel %vm301, %v296, 0.0
    %303 = vadd.xlane.f32.xlu0 %v302
    %v304 = vpop.xlane.xlu0 %303
    %v305 = vsel %vm301, %v298, 0.0
    %306 = vadd.xlane.f32.xlu0 %v305
    %v307 = vpop.xlane.xlu0 %306
    %vm308 = vcmask 116736
    %v309 = vsel %vm308, %v296, 0.0
    %310 = vadd.xlane.f32.xlu0 %v309
    %v311 = vpop.xlane.xlu0 %310
    %v312 = vsel %vm308, %v298, 0.0
    %313 = vadd.xlane.f32.xlu0 %v312
    %v314 = vpop.xlane.xlu0 %313
    %315 = vrot.lane.b32.xlu0 %v296, 127
    %v316 = vpop.permute.xlu0 %315
    %317 = vrot.lane.b32.xlu0 %v298, 127
    %v318 = vpop.permute.xlu0 %317
    %v321 = vsel %vm308, %v316, 0.0
    %322 = vadd.xlane.f32.xlu0 %v321
    %v323 = vpop.xlane.xlu0 %322
    %v324 = vsel %vm308, %v318, 0.0
    %325 = vadd.xlane.f32.xlu0 %v324
    %v326 = vpop.xlane.xlu0 %325
    %v327 = vld [vmem:[%s2] sm:$0x7]
    %s328 = scalar_lea.vmem %s2, 4
    %v329 = vld [vmem:[%s328] sm:$0x7]
    %v332 = vlaneseq
    %v333 = vand.u32 %v332, 127
    %v334 = vperm.slane %v304, %v333
    %v335 = vperm.slane %v307, %v333
    %v336 = vsel %vm293, %v335, %v334
    %vm337 = vcmask 23552
    %v338 = vsel %vm337, %v336, 0
    %vm340 = vcmask 1042432
    %v342 = vsel %vm340, %v329, 0
    %344 = vmatpush.msra.mxu0 0.0
    %345 = vmatpush.msra.mxu0 0.0
    %346 = vmatpush.msra.mxu0 0.0
    %347 = vmatpush.msra.mxu0 0.0
    %348 = vmatpush.msra.mxu0 0.0
    %349 = vmatpush.msra.mxu0 0.0
    %350 = vmatpush.msra.mxu0 0.0
    %351 = vmatpush.msra.mxu0 0.0
    %352 = vmatpush.msra.mxu0 0.0
    %353 = vmatpush.msra.mxu0 0.0
    %354 = vmatpush.msra.mxu0 0.0
    %355 = vmatpush.msra.mxu0 0.0
    %356 = vmatpush.msra.mxu0 0.0
    %357 = vmatpush.msra.mxu0 0.0
    %358 = vmatpush.msra.mxu0 0.0
    %359 = vmatpush.msra.mxu0 %v342
    %360 = vmatmul.f32.gmra.mxu0 %v338
    %v361 = vpop.f32.mrf.mxu0
    %v362 = vadd.f32 0.0, %v361
    %363 = vdwg.mxu0
    %v366 = vperm.slane %v311, %v333
    %v367 = vperm.slane %v314, %v333
    %v368 = vsel %vm293, %v367, %v366
    %v369 = vsel %vm337, %v368, 0
    %v372 = vsel %vm340, %v327, 0
    %374 = vmatpush.msra.mxu0 0.0
    %375 = vmatpush.msra.mxu0 0.0
    %376 = vmatpush.msra.mxu0 0.0
    %377 = vmatpush.msra.mxu0 0.0
    %378 = vmatpush.msra.mxu0 0.0
    %379 = vmatpush.msra.mxu0 0.0
    %380 = vmatpush.msra.mxu0 0.0
    %381 = vmatpush.msra.mxu0 0.0
    %382 = vmatpush.msra.mxu0 0.0
    %383 = vmatpush.msra.mxu0 0.0
    %384 = vmatpush.msra.mxu0 0.0
    %385 = vmatpush.msra.mxu0 0.0
    %386 = vmatpush.msra.mxu0 0.0
    %387 = vmatpush.msra.mxu0 0.0
    %388 = vmatpush.msra.mxu0 0.0
    %389 = vmatpush.msra.mxu0 %v372
    %390 = vmatmul.f32.gmra.mxu0 %v369
    %v391 = vpop.f32.mrf.mxu0
    %v392 = vadd.f32 %v362, %v391
    %393 = vdwg.mxu0
    %s394 = scalar_lea.vmem %s2, 8
    %v395 = vld [vmem:[%s394] sm:$0x7]
    %v398 = vperm.slane %v323, %v333
    %v399 = vperm.slane %v326, %v333
    %v400 = vsel %vm293, %v399, %v398
    %v401 = vsel %vm337, %v400, 0
    %v404 = vsel %vm340, %v395, 0
    %406 = vmatpush.msra.mxu0 0.0
    %407 = vmatpush.msra.mxu0 0.0
    %408 = vmatpush.msra.mxu0 0.0
    %409 = vmatpush.msra.mxu0 0.0
    %410 = vmatpush.msra.mxu0 0.0
    %411 = vmatpush.msra.mxu0 0.0
    %412 = vmatpush.msra.mxu0 0.0
    %413 = vmatpush.msra.mxu0 0.0
    %414 = vmatpush.msra.mxu0 0.0
    %415 = vmatpush.msra.mxu0 0.0
    %416 = vmatpush.msra.mxu0 0.0
    %417 = vmatpush.msra.mxu0 0.0
    %418 = vmatpush.msra.mxu0 0.0
    %419 = vmatpush.msra.mxu0 0.0
    %420 = vmatpush.msra.mxu0 0.0
    %421 = vmatpush.msra.mxu0 %v404
    %422 = vmatmul.f32.gmra.mxu0 %v401
    %v423 = vpop.f32.mrf.mxu0
    %v424 = vadd.f32 0.0, %v423
    %425 = vdwg.mxu0
    %v426 = vadd.f32 %v392, %v424
    %v433 = vsel %vm293, %v104, %v95
    %v434 = vsel %vm295, %v113, %v433
    %v435 = vsel %vm293, %v131, %v122
    %v436 = vsel %vm295, %v140, %v435
    %v439 = vsel %vm301, %v434, 0.0
    %440 = vadd.xlane.f32.xlu0 %v439
    %v441 = vpop.xlane.xlu0 %440
    %v442 = vsel %vm301, %v436, 0.0
    %443 = vadd.xlane.f32.xlu0 %v442
    %v444 = vpop.xlane.xlu0 %443
    %v445 = vsel %vm308, %v434, 0.0
    %446 = vadd.xlane.f32.xlu0 %v445
    %v447 = vpop.xlane.xlu0 %446
    %v448 = vsel %vm308, %v436, 0.0
    %449 = vadd.xlane.f32.xlu0 %v448
    %v450 = vpop.xlane.xlu0 %449
    %451 = vrot.lane.b32.xlu0 %v434, 127
    %v452 = vpop.permute.xlu0 %451
    %453 = vrot.lane.b32.xlu0 %v436, 127
    %v454 = vpop.permute.xlu0 %453
    %v457 = vsel %vm308, %v452, 0.0
    %458 = vadd.xlane.f32.xlu0 %v457
    %v459 = vpop.xlane.xlu0 %458
    %v460 = vsel %vm308, %v454, 0.0
    %461 = vadd.xlane.f32.xlu0 %v460
    %v462 = vpop.xlane.xlu0 %461
    %s463 = scalar_lea.vmem %s2, 12
    %v464 = vld [vmem:[%s463] sm:$0x7]
    %v467 = vperm.slane %v447, %v333
    %v468 = vperm.slane %v450, %v333
    %v469 = vsel %vm293, %v468, %v467
    %v470 = vsel %vm337, %v469, 0
    %v473 = vsel %vm340, %v464, 0
    %475 = vmatpush.msra.mxu0 0.0
    %476 = vmatpush.msra.mxu0 0.0
    %477 = vmatpush.msra.mxu0 0.0
    %478 = vmatpush.msra.mxu0 0.0
    %479 = vmatpush.msra.mxu0 0.0
    %480 = vmatpush.msra.mxu0 0.0
    %481 = vmatpush.msra.mxu0 0.0
    %482 = vmatpush.msra.mxu0 0.0
    %483 = vmatpush.msra.mxu0 0.0
    %484 = vmatpush.msra.mxu0 0.0
    %485 = vmatpush.msra.mxu0 0.0
    %486 = vmatpush.msra.mxu0 0.0
    %487 = vmatpush.msra.mxu0 0.0
    %488 = vmatpush.msra.mxu0 0.0
    %489 = vmatpush.msra.mxu0 0.0
    %490 = vmatpush.msra.mxu0 %v473
    %491 = vmatmul.f32.gmra.mxu0 %v470
    %v492 = vpop.f32.mrf.mxu0
    %v493 = vadd.f32 0.0, %v492
    %494 = vdwg.mxu0
    %v495 = vadd.f32 %v426, %v493
    %s496 = scalar_lea.vmem %s2, 16
    %v497 = vld [vmem:[%s496] sm:$0x7]
    %v500 = vperm.slane %v441, %v333
    %v501 = vperm.slane %v444, %v333
    %v502 = vsel %vm293, %v501, %v500
    %v503 = vsel %vm337, %v502, 0
    %v506 = vsel %vm340, %v497, 0
    %508 = vmatpush.msra.mxu0 0.0
    %509 = vmatpush.msra.mxu0 0.0
    %510 = vmatpush.msra.mxu0 0.0
    %511 = vmatpush.msra.mxu0 0.0
    %512 = vmatpush.msra.mxu0 0.0
    %513 = vmatpush.msra.mxu0 0.0
    %514 = vmatpush.msra.mxu0 0.0
    %515 = vmatpush.msra.mxu0 0.0
    %516 = vmatpush.msra.mxu0 0.0
    %517 = vmatpush.msra.mxu0 0.0
    %518 = vmatpush.msra.mxu0 0.0
    %519 = vmatpush.msra.mxu0 0.0
    %520 = vmatpush.msra.mxu0 0.0
    %521 = vmatpush.msra.mxu0 0.0
    %522 = vmatpush.msra.mxu0 0.0
    %523 = vmatpush.msra.mxu0 %v506
    %524 = vmatmul.f32.gmra.mxu0 %v503
    %v525 = vpop.f32.mrf.mxu0
    %v526 = vadd.f32 0.0, %v525
    %527 = vdwg.mxu0
    %v528 = vadd.f32 %v495, %v526
    %s529 = scalar_lea.vmem %s2, 20
    %v530 = vld [vmem:[%s529] sm:$0x7]
    %v533 = vperm.slane %v459, %v333
    %v534 = vperm.slane %v462, %v333
    %v535 = vsel %vm293, %v534, %v533
    %v536 = vsel %vm337, %v535, 0
    %v539 = vsel %vm340, %v530, 0
    %541 = vmatpush.msra.mxu0 0.0
    %542 = vmatpush.msra.mxu0 0.0
    %543 = vmatpush.msra.mxu0 0.0
    %544 = vmatpush.msra.mxu0 0.0
    %545 = vmatpush.msra.mxu0 0.0
    %546 = vmatpush.msra.mxu0 0.0
    %547 = vmatpush.msra.mxu0 0.0
    %548 = vmatpush.msra.mxu0 0.0
    %549 = vmatpush.msra.mxu0 0.0
    %550 = vmatpush.msra.mxu0 0.0
    %551 = vmatpush.msra.mxu0 0.0
    %552 = vmatpush.msra.mxu0 0.0
    %553 = vmatpush.msra.mxu0 0.0
    %554 = vmatpush.msra.mxu0 0.0
    %555 = vmatpush.msra.mxu0 0.0
    %556 = vmatpush.msra.mxu0 %v539
    %557 = vmatmul.f32.gmra.mxu0 %v536
    %v558 = vpop.f32.mrf.mxu0
    %v559 = vadd.f32 0.0, %v558
    %560 = vdwg.mxu0
    %v561 = vadd.f32 %v528, %v559
    %v568 = vsel %vm293, %v250, %v241
    %v569 = vsel %vm295, %v259, %v568
    %v570 = vsel %vm293, %v277, %v268
    %v571 = vsel %vm295, %v286, %v570
    %v574 = vsel %vm301, %v569, 0.0
    %575 = vadd.xlane.f32.xlu0 %v574
    %v576 = vpop.xlane.xlu0 %575
    %v577 = vsel %vm301, %v571, 0.0
    %578 = vadd.xlane.f32.xlu0 %v577
    %v579 = vpop.xlane.xlu0 %578
    %v580 = vsel %vm308, %v569, 0.0
    %581 = vadd.xlane.f32.xlu0 %v580
    %v582 = vpop.xlane.xlu0 %581
    %v583 = vsel %vm308, %v571, 0.0
    %584 = vadd.xlane.f32.xlu0 %v583
    %v585 = vpop.xlane.xlu0 %584
    %586 = vrot.lane.b32.xlu0 %v569, 127
    %v587 = vpop.permute.xlu0 %586
    %588 = vrot.lane.b32.xlu0 %v571, 127
    %v589 = vpop.permute.xlu0 %588
    %v592 = vsel %vm308, %v587, 0.0
    %593 = vadd.xlane.f32.xlu0 %v592
    %v594 = vpop.xlane.xlu0 %593
    %v595 = vsel %vm308, %v589, 0.0
    %596 = vadd.xlane.f32.xlu0 %v595
    %v597 = vpop.xlane.xlu0 %596
    %s598 = scalar_lea.vmem %s2, 24
    %v599 = vld [vmem:[%s598] sm:$0x7]
    %v602 = vperm.slane %v582, %v333
    %v603 = vperm.slane %v585, %v333
    %v604 = vsel %vm293, %v603, %v602
    %v605 = vsel %vm337, %v604, 0
    %v608 = vsel %vm340, %v599, 0
    %610 = vmatpush.msra.mxu0 0.0
    %611 = vmatpush.msra.mxu0 0.0
    %612 = vmatpush.msra.mxu0 0.0
    %613 = vmatpush.msra.mxu0 0.0
    %614 = vmatpush.msra.mxu0 0.0
    %615 = vmatpush.msra.mxu0 0.0
    %616 = vmatpush.msra.mxu0 0.0
    %617 = vmatpush.msra.mxu0 0.0
    %618 = vmatpush.msra.mxu0 0.0
    %619 = vmatpush.msra.mxu0 0.0
    %620 = vmatpush.msra.mxu0 0.0
    %621 = vmatpush.msra.mxu0 0.0
    %622 = vmatpush.msra.mxu0 0.0
    %623 = vmatpush.msra.mxu0 0.0
    %624 = vmatpush.msra.mxu0 0.0
    %625 = vmatpush.msra.mxu0 %v608
    %626 = vmatmul.f32.gmra.mxu0 %v605
    %v627 = vpop.f32.mrf.mxu0
    %v628 = vadd.f32 0.0, %v627
    %629 = vdwg.mxu0
    %v630 = vadd.f32 %v561, %v628
    %s631 = scalar_lea.vmem %s2, 28
    %v632 = vld [vmem:[%s631] sm:$0x7]
    %v635 = vperm.slane %v576, %v333
    %v636 = vperm.slane %v579, %v333
    %v637 = vsel %vm293, %v636, %v635
    %v638 = vsel %vm337, %v637, 0
    %v641 = vsel %vm340, %v632, 0
    %643 = vmatpush.msra.mxu0 0.0
    %644 = vmatpush.msra.mxu0 0.0
    %645 = vmatpush.msra.mxu0 0.0
    %646 = vmatpush.msra.mxu0 0.0
    %647 = vmatpush.msra.mxu0 0.0
    %648 = vmatpush.msra.mxu0 0.0
    %649 = vmatpush.msra.mxu0 0.0
    %650 = vmatpush.msra.mxu0 0.0
    %651 = vmatpush.msra.mxu0 0.0
    %652 = vmatpush.msra.mxu0 0.0
    %653 = vmatpush.msra.mxu0 0.0
    %654 = vmatpush.msra.mxu0 0.0
    %655 = vmatpush.msra.mxu0 0.0
    %656 = vmatpush.msra.mxu0 0.0
    %657 = vmatpush.msra.mxu0 0.0
    %658 = vmatpush.msra.mxu0 %v641
    %659 = vmatmul.f32.gmra.mxu0 %v638
    %v660 = vpop.f32.mrf.mxu0
    %v661 = vadd.f32 0.0, %v660
    %662 = vdwg.mxu0
    %v663 = vadd.f32 %v630, %v661
    %s664 = scalar_lea.vmem %s2, 32
    %v665 = vld [vmem:[%s664] sm:$0x7]
    %v668 = vperm.slane %v594, %v333
    %v669 = vperm.slane %v597, %v333
    %v670 = vsel %vm293, %v669, %v668
    %v671 = vsel %vm337, %v670, 0
    %v674 = vsel %vm340, %v665, 0
    %676 = vmatpush.msra.mxu0 0.0
    %677 = vmatpush.msra.mxu0 0.0
    %678 = vmatpush.msra.mxu0 0.0
    %679 = vmatpush.msra.mxu0 0.0
    %680 = vmatpush.msra.mxu0 0.0
    %681 = vmatpush.msra.mxu0 0.0
    %682 = vmatpush.msra.mxu0 0.0
    %683 = vmatpush.msra.mxu0 0.0
    %684 = vmatpush.msra.mxu0 0.0
    %685 = vmatpush.msra.mxu0 0.0
    %686 = vmatpush.msra.mxu0 0.0
    %687 = vmatpush.msra.mxu0 0.0
    %688 = vmatpush.msra.mxu0 0.0
    %689 = vmatpush.msra.mxu0 0.0
    %690 = vmatpush.msra.mxu0 0.0
    %691 = vmatpush.msra.mxu0 %v674
    %692 = vmatmul.f32.gmra.mxu0 %v671
    %v693 = vpop.f32.mrf.mxu0
    %v694 = vadd.f32 0.0, %v693
    %695 = vdwg.mxu0
    %v696 = vadd.f32 %v663, %v694
    %v697 = vld [vmem:[%s3] sm:$0x1]
    %v699 = vperm.slane %v697, 0
    %v701 = vadd.f32 %v696, %v699
    %702 = vst [vmem:[#allocation2] sm:$0x3] %v701
    // Predicated region
    $region18: #{forward.1} parent=1 // pred_check
      _
    $region19: #{forward.1} parent=1 // pred_check_branch
      %704 = sbr.rel (0) target = $region21
    $region20: #{forward.1} parent=1 // pred_region
      %706 = vsyncadd [#allocation3], 0
      %s708 = sshll.u32 [#allocation2], 4
      %s709 = int_to_ptr.vmem [resolvable:$true] %s708
      %s710 = sshll.u32 %s4, 4
      %s711 = int_to_ptr.hbm [resolvable:$true] %s710
      %713 = dma.vmem_to_hbm [thread:$0]  %s709, 32, %s711, [#allocation3]
    $region21: #{forward.1} parent=1 // pred_fallthru
      _
    // Predicated region
    $region22: #{forward.1} parent=1 // pred_check
      _
    $region23: #{forward.1} parent=1 // pred_check_branch
      %715 = sbr.rel (0) target = $region25
    $region24: #{forward.1} parent=1 // pred_region
      _
    $region25: #{forward.1} parent=1 // pred_fallthru
      _
    // Predicated region
    $region26: #{forward.1} parent=1 // pred_check
      _
    $region27: #{forward.1} parent=1 // pred_check_branch
      %717 = sbr.rel (0) target = $region29
    $region28: #{forward.1} parent=1 // pred_region
      %719 = dma.done [#allocation3], 32
    $region29: #{forward.1} parent=1 // pred_fallthru
      _
    // Predicated region
    $region30: #{forward.1} parent=1 // pred_check
      _
    $region31: #{forward.1} parent=1 // pred_check_branch
      %721 = sbr.rel (0) target = $region33
    $region32: #{forward.1} parent=1 // pred_region
      _
    $region33: #{forward.1} parent=1 // pred_fallthru
      _
    %722 = vsyncpa [#allocation3], 1

</llo_original>
